<compile_context>
chip_gen: v7x
topology: tpu7x:2x2x1
jax: 0.10.0
libtpu: 0.0.40
codegen_flags: <defaults>
</compile_context>

<pallas_src>
import functools
import numpy as np
import jax
import jax.numpy as jnp
from jax.experimental import pallas as pl
from jax.experimental.pallas import tpu as pltpu


# ----------------------------- mask construction (glue, plain numpy) -----------------------------
def get_mask(in_features, out_features, in_flow_features, mask_type=None):
    """mask_type: 'input' | None | 'output' (see MADE paper fig. 1)."""
    if mask_type == 'input':
        in_degrees = np.arange(in_features) % in_flow_features
    else:
        in_degrees = np.arange(in_features) % (in_flow_features - 1)
    if mask_type == 'output':
        out_degrees = np.arange(out_features) % in_flow_features - 1
    else:
        out_degrees = np.arange(out_features) % (in_flow_features - 1)
    return (out_degrees[:, None] >= in_degrees[None, :]).astype(np.float32)


def _round_up(n, m):
    return ((n + m - 1) // m) * m


# ----------------------------------------- Pallas kernel -----------------------------------------
def made_direct_kernel(x_ref, wT_ref, b_ref, ens_ref, u_ref):
    # x_ref:   (TB, Dp)   input batch tile
    # wT_ref:  (Dp, Dp)   ((W * input_mask)[:D]).T, padded; resident across the grid
    # b_ref:   (1, Dp)    bias (only the m-half), padded
    # ens_ref: (1, Dp)    exp(-sigma), precomputed in the wrapper, padded
    # u_ref:   (TB, Dp)   output u tile
    x = x_ref[...]
    # Hot path: masked-linear matmul on the MXU, f32 accumulation. Only the m-chunk is computed.
    m = jnp.dot(x, wT_ref[...], preferred_element_type=jnp.float32) + b_ref[...]
    u_ref[...] = (x - m) * ens_ref[...]


# --------------------------------------------- wrapper --------------------------------------------
@functools.partial(jax.jit, static_argnames=("block_b",))
def made_forward_direct(x, W, b, input_mask, sigma, *, block_b=512):
    """MADE forward, mode='direct', cond_inputs=None. Returns (u, logdet)."""
    B, D = x.shape

    # Parameter prep (glue; fused/amortized under jit).
    # Only the first D output rows of the masked linear feed m = h[:, :D].
    WmT = ((W * input_mask)[:D, :]).T           # (D, D)
    b_m = b[:D]                                 # (D,)
    exp_neg_sigma = jnp.exp(-sigma)             # (D,)
    logdet = -jnp.sum(sigma).reshape(1)         # PyTorch logdet shape: (1,)

    # Lane-dense, sublane-aligned padding.
    Dp = _round_up(max(D, 1), 128)              # lane axis -> multiple of 128
    TB = min(_round_up(block_b, 8), _round_up(B, 8))   # batch tile, multiple of 8 sublanes
    Bp = _round_up(B, TB)
    n_tiles = pl.cdiv(Bp, TB)

    f32 = jnp.float32
    x_p = jnp.zeros((Bp, Dp), f32).at[:B, :D].set(x.astype(f32))
    w_p = jnp.zeros((Dp, Dp), f32).at[:D, :D].set(WmT.astype(f32))
    b_p = jnp.zeros((1, Dp), f32).at[0, :D].set(b_m.astype(f32))
    e_p = jnp.zeros((1, Dp), f32).at[0, :D].set(exp_neg_sigma.astype(f32))

    # VMEM budget: resident weight (Dp*Dp*4) + double-buffered x/u tiles + bias/scale rows.
    vmem_needed = 4 * (Dp * Dp + 2 * 2 * TB * Dp + 2 * Dp) + (1 << 20)
    compiler_params = pltpu.CompilerParams(
        dimension_semantics=("parallel",),      # megacore sharding on v7x; no-op on v5e/v6e
        vmem_limit_bytes=max(vmem_needed, 32 << 20),
    )
    # TODO(synk): for very large D (weight >~ half of VMEM) add a K-reduction grid axis with a
    #             VMEM accumulator instead of keeping the full (Dp, Dp) weight resident.

    u_p = pl.pallas_call(
        made_direct_kernel,
        out_shape=jax.ShapeDtypeStruct((Bp, Dp), f32),
        grid=(n_tiles,),
        in_specs=[
            pl.BlockSpec((TB, Dp), lambda i: (i, 0)),     # x: tiled over batch
            pl.BlockSpec((Dp, Dp), lambda i: (0, 0)),     # weight: resident
            pl.BlockSpec((1, Dp), lambda i: (0, 0)),      # bias: resident
            pl.BlockSpec((1, Dp), lambda i: (0, 0)),      # exp(-sigma): resident
        ],
        out_specs=pl.BlockSpec((TB, Dp), lambda i: (i, 0)),
        compiler_params=compiler_params,
    )(x_p, w_p, b_p, e_p)

    return u_p[:B, :D], logdet

# TODO(synk): cond_inputs path (extra un-masked linear on cond features) and the sequential
#             'inverse' mode are not implemented; module is used here with num_cond_inputs=None.


# ------------------------------------------ reference (JAX) ---------------------------------------
def made_forward_ref(x, W, b, input_mask, sigma):
    h = x @ (W * input_mask).T + b
    D = x.shape[1]
    m = h[:, :D]
    u = (x - m) * jnp.exp(-sigma)
    return u, -jnp.sum(sigma, keepdims=True)


if __name__ == "__main__":
    num_inputs = 8        # D
    num_hidden = 32       # present in __init__ but unused by this forward (trunk = Identity)
    batch = 4

    key = jax.random.PRNGKey(0)
    kx, kw, kb, ks = jax.random.split(key, 4)

    # Deterministic synthetic parameters matching the module's shapes.
    # joiner: MaskedLinear(num_inputs, 2*num_inputs) -> W (2D, D), b (2D,)
    W = jax.random.normal(kw, (2 * num_inputs, num_inputs), dtype=jnp.float32) * 0.1
    b = jax.random.normal(kb, (2 * num_inputs,), dtype=jnp.float32) * 0.1
    # sigma: nn.Parameter(zeros(num_inputs)) -- small random values to exercise exp(-sigma)
    sigma = jax.random.normal(ks, (num_inputs,), dtype=jnp.float32) * 0.1

    input_mask = jnp.asarray(
        get_mask(num_inputs, num_inputs * 2, num_inputs, mask_type='input'))

    x = jax.random.normal(kx, (batch, num_inputs), dtype=jnp.float32)

    u, logdet = made_forward_direct(x, W, b, input_mask, sigma)
    jax.block_until_ready((u, logdet))

    u_ref, logdet_ref = made_forward_ref(x, W, b, input_mask, sigma)
    np.testing.assert_allclose(np.asarray(u), np.asarray(u_ref), rtol=1e-5, atol=1e-5)
    np.testing.assert_allclose(np.asarray(logdet), np.asarray(logdet_ref), rtol=1e-5, atol=1e-5)

    print("KERNEL_OK")
</pallas_src>

<mosaic_0001>
module attributes {stable_mosaic.version = 11 : i64} {
  func.func @made_direct_kernel(%arg0: i32, %arg1: memref<8x128xf32, #tpu.memory_space<vmem>>, %arg2: memref<128x128xf32, #tpu.memory_space<vmem>>, %arg3: memref<1x128xf32, #tpu.memory_space<vmem>>, %arg4: memref<1x128xf32, #tpu.memory_space<vmem>>, %arg5: memref<8x128xf32, #tpu.memory_space<vmem>>) attributes {dimension_semantics = [#tpu.dimension_semantics<parallel>], iteration_bounds = array<i64: 1>, scalar_prefetch = 0 : i64, scratch_operands = 0 : i64, tpu.core_type = #tpu.core_type<tc>, window_params = [{transform_indices = @transform_0, window_bounds = array<i64: 8, 128>}, {pipeline_mode = #tpu.pipeline_mode<synchronous>, transform_indices = @transform_1, window_bounds = array<i64: 128, 128>}, {pipeline_mode = #tpu.pipeline_mode<synchronous>, transform_indices = @transform_2, window_bounds = array<i64: 1, 128>}, {pipeline_mode = #tpu.pipeline_mode<synchronous>, transform_indices = @transform_3, window_bounds = array<i64: 1, 128>}, {transform_indices = @transform_4, window_bounds = array<i64: 8, 128>}]} {
    %c0 = arith.constant 0 : index
    %c0_0 = arith.constant 0 : index
    %0 = vector.load %arg1[%c0, %c0_0] : memref<8x128xf32, #tpu.memory_space<vmem>>, vector<8x128xf32>
    %c0_1 = arith.constant 0 : index
    %c0_2 = arith.constant 0 : index
    %1 = vector.load %arg2[%c0_1, %c0_2] : memref<128x128xf32, #tpu.memory_space<vmem>>, vector<128x128xf32>
    %cst = arith.constant dense<0.000000e+00> : vector<8x128xf32>
    %2 = tpu.matmul %0, %1, %cst {dimension_numbers = #tpu.dot_dimension_numbers<[1], [0], [0], [1], [0, 0, 1, 1], [], []>} : vector<8x128xf32>, vector<128x128xf32>, vector<8x128xf32> -> vector<8x128xf32>
    %c0_3 = arith.constant 0 : index
    %c0_4 = arith.constant 0 : index
    %3 = vector.load %arg3[%c0_3, %c0_4] : memref<1x128xf32, #tpu.memory_space<vmem>>, vector<1x128xf32>
    %4 = vector.broadcast %3 : vector<1x128xf32> to vector<8x128xf32>
    %5 = arith.addf %2, %4 : vector<8x128xf32>
    %6 = arith.subf %0, %5 : vector<8x128xf32>
    %c0_5 = arith.constant 0 : index
    %c0_6 = arith.constant 0 : index
    %7 = vector.load %arg4[%c0_5, %c0_6] : memref<1x128xf32, #tpu.memory_space<vmem>>, vector<1x128xf32>
    %8 = vector.broadcast %7 : vector<1x128xf32> to vector<8x128xf32>
    %9 = arith.mulf %6, %8 : vector<8x128xf32>
    %c0_7 = arith.constant 0 : index
    %c0_8 = arith.constant 0 : index
    %10 = vector.load %arg5[%c0_7, %c0_8] : memref<8x128xf32, #tpu.memory_space<vmem>>, vector<8x128xf32>
    tpu.vector_store %arg5[%c0_7, %c0_8], %9 {strides = array<i32>} : memref<8x128xf32, #tpu.memory_space<vmem>>, vector<8x128xf32>,
    return
  }
  func.func @transform_0(%arg0: i32) -> (i32, i32) {
    %c0_i32 = arith.constant 0 : i32
    %c0_i32_0 = arith.constant 0 : i32
    return %arg0, %c0_i32 : i32, i32
  }
  func.func @transform_1(%arg0: i32) -> (i32, i32) {
    %c0_i32 = arith.constant 0 : i32
    %c0_i32_0 = arith.constant 0 : i32
    %c0_i32_1 = arith.constant 0 : i32
    return %c0_i32, %c0_i32_0 : i32, i32
  }
  func.func @transform_2(%arg0: i32) -> (i32, i32) {
    %c0_i32 = arith.constant 0 : i32
    %c0_i32_0 = arith.constant 0 : i32
    %c0_i32_1 = arith.constant 0 : i32
    return %c0_i32, %c0_i32_0 : i32, i32
  }
  func.func @transform_3(%arg0: i32) -> (i32, i32) {
    %c0_i32 = arith.constant 0 : i32
    %c0_i32_0 = arith.constant 0 : i32
    %c0_i32_1 = arith.constant 0 : i32
    return %c0_i32, %c0_i32_0 : i32, i32
  }
  func.func @transform_4(%arg0: i32) -> (i32, i32) {
    %c0_i32 = arith.constant 0 : i32
    %c0_i32_0 = arith.constant 0 : i32
    return %arg0, %c0_i32 : i32, i32
  }
}

</mosaic_0001>

<llo_original>
// kernel: mul.1
$region0: #{mul.1}
  #allocation0 [shape = 's32[1]{0}', space=sflag, size = 0x4, scoped, tag = 'scoped memory for mul.1']
  %s0 = inlined_call_operand.vmem [shape: f32[16,8], index: 0, kind: input, shape index: {}]
  %s1 = inlined_call_operand.vmem [shape: f32[16,8], index: 1, kind: input, shape index: {}]
  %s2 = inlined_call_operand.vmem [shape: f32[16,8], index: 2, kind: output, shape index: {}]
  %v3 = vld [vmem:[%s0] sm:$0xff]
  %v4 = vld [vmem:[%s1] sm:$0xff]
  %5 = xla_tuple %v3, %v4
  %6 = xla_tuple %5
  %v7 = vmul.f32 %v3, %v4
  %8 = xla_tuple %v7
  %9 = vst [vmem:[%s2] sm:$0xff] %v7

// kernel: made_forward_direct.1
$region0: #{made_forward_direct.1}
  #allocation0 [shape = 'u32[]', space=smem, size = 0x4, offset = 0x4, fixed_abs, tag = 'smem constant byte address 0x4 - core index']
  #allocation1 [shape = 'u32[144,128]{1,0:T(1,128)}', space=vmem, size = 0x12000, scoped, tag = 'internal scratch']
  %s0 = inlined_call_operand.vmem [shape: f32[8,128], index: 0, kind: input, shape index: {}]
  %s1 = inlined_call_operand.vmem [shape: f32[128,128], index: 1, kind: input, shape index: {}]
  %s2 = inlined_call_operand.vmem [shape: f32[1,128], index: 2, kind: input, shape index: {}]
  %s3 = inlined_call_operand.vmem [shape: f32[1,128], index: 3, kind: input, shape index: {}]
  %s4 = inlined_call_operand.vmem [shape: f32[8,128], index: 4, kind: output, shape index: {}]
  %s5 = sld [smem:[#allocation0]]
  $region26: #{made_forward_direct.1} parent=0
    _
  %s7 = ssub.s32 1, %s5
  %s8 = scalar_select 0, %s7, %s5
  // Predicated region
  $region2: #{made_forward_direct.1} parent=0 // pred_check
    _
  $region3: #{made_forward_direct.1} parent=0 // pred_check_branch
    %10 = sbr.rel (0) target = $region5
  $region4: #{made_forward_direct.1} parent=0 // pred_region
    _
  $region5: #{made_forward_direct.1} parent=0 // pred_fallthru
    _
  // Predicated region
  $region6: #{made_forward_direct.1} parent=0 // pred_check
    _
  $region7: #{made_forward_direct.1} parent=0 // pred_check_branch
    %12 = sbr.rel (0) target = $region9
  $region8: #{made_forward_direct.1} parent=0 // pred_region
    _
  $region9: #{made_forward_direct.1} parent=0 // pred_fallthru
    _
  // Predicated region
  $region10: #{made_forward_direct.1} parent=0 // pred_check
    _
  $region11: #{made_forward_direct.1} parent=0 // pred_check_branch
    %14 = sbr.rel (0) target = $region13
  $region12: #{made_forward_direct.1} parent=0 // pred_region
    _
  $region13: #{made_forward_direct.1} parent=0 // pred_fallthru
    _
  // Predicated region
  $region14: #{made_forward_direct.1} parent=0 // pred_check
    _
  $region15: #{made_forward_direct.1} parent=0 // pred_check_branch
    %16 = sbr.rel (0) target = $region17
  $region16: #{made_forward_direct.1} parent=0 // pred_region
    _
  $region17: #{made_forward_direct.1} parent=0 // pred_fallthru
    _
  %v17 = vld [vmem:[%s0] sm:$0xff]
  %v18 = vld [vmem:[%s1] sm:$0xff]
  %v19 = vld [vmem:[%s1 + $0x8] sm:$0xff]
  %v20 = vld [vmem:[%s1 + $0x10] sm:$0xff]
  %v21 = vld [vmem:[%s1 + $0x18] sm:$0xff]
  %v22 = vld [vmem:[%s1 + $0x20] sm:$0xff]
  %v23 = vld [vmem:[%s1 + $0x28] sm:$0xff]
  %v24 = vld [vmem:[%s1 + $0x30] sm:$0xff]
  %v25 = vld [vmem:[%s1 + $0x38] sm:$0xff]
  %v26 = vld [vmem:[%s1 + $0x40] sm:$0xff]
  %v27 = vld [vmem:[%s1 + $0x48] sm:$0xff]
  %v28 = vld [vmem:[%s1 + $0x50] sm:$0xff]
  %v29 = vld [vmem:[%s1 + $0x58] sm:$0xff]
  %v30 = vld [vmem:[%s1 + $0x60] sm:$0xff]
  %v31 = vld [vmem:[%s1 + $0x68] sm:$0xff]
  %v32 = vld [vmem:[%s1 + $0x70] sm:$0xff]
  %v33 = vld [vmem:[%s1 + $0x78] sm:$0xff]
  %v34 = vld [vmem:[%s2] sm:$0x1]
  %v36 = vlaneseq
  %v37 = vshrl.u32 %v36, 7
  %v38 = vsub.s32 0, %v37
  %v39 = vrot.slane %v34, %v38
  %41 = vmatprep.subr.mxu0 0.0
  %42 = vmatpush1.msra.mxu0 %v18
  %43 = vmatprep.subr.mxu0 0.0
  %44 = vmatpush1.msra.mxu0 %v19
  %45 = vmatprep.subr.mxu0 0.0
  %46 = vmatpush1.msra.mxu0 %v20
  %47 = vmatprep.subr.mxu0 0.0
  %48 = vmatpush1.msra.mxu0 %v21
  %49 = vmatprep.subr.mxu0 0.0
  %50 = vmatpush1.msra.mxu0 %v22
  %51 = vmatprep.subr.mxu0 0.0
  %52 = vmatpush1.msra.mxu0 %v23
  %53 = vmatprep.subr.mxu0 0.0
  %54 = vmatpush1.msra.mxu0 %v24
  %55 = vmatprep.subr.mxu0 0.0
  %56 = vmatpush1.msra.mxu0 %v25
  %57 = vmatprep.subr.mxu0 0.0
  %58 = vmatpush1.msra.mxu0 %v26
  %59 = vmatprep.subr.mxu0 0.0
  %60 = vmatpush1.msra.mxu0 %v27
  %61 = vmatprep.subr.mxu0 0.0
  %62 = vmatpush1.msra.mxu0 %v28
  %63 = vmatprep.subr.mxu0 0.0
  %64 = vmatpush1.msra.mxu0 %v29
  %65 = vmatprep.subr.mxu0 0.0
  %66 = vmatpush1.msra.mxu0 %v30
  %67 = vmatprep.subr.mxu0 0.0
  %68 = vmatpush1.msra.mxu0 %v31
  %69 = vmatprep.subr.mxu0 0.0
  %70 = vmatpush1.msra.mxu0 %v32
  %71 = vmatprep.subr.mxu0 0.0
  %72 = vmatpush1.msra.mxu0 %v33
  %73 = vmatprep.subr.mxu0 0.0
  %74 = vmatpush1.msra.mxu0 0.0
  %75 = vmatprep.subr.mxu0 0.0
  %76 = vmatpush1.msra.mxu0 0.0
  %77 = vmatprep.subr.mxu0 0.0
  %78 = vmatpush1.msra.mxu0 0.0
  %79 = vmatprep.subr.mxu0 0.0
  %80 = vmatpush1.msra.mxu0 0.0
  %81 = vmatprep.subr.mxu0 0.0
  %82 = vmatpush1.msra.mxu0 0.0
  %83 = vmatprep.subr.mxu0 0.0
  %84 = vmatpush1.msra.mxu0 0.0
  %85 = vmatprep.subr.mxu0 0.0
  %86 = vmatpush1.msra.mxu0 0.0
  %87 = vmatprep.subr.mxu0 0.0
  %88 = vmatpush1.msra.mxu0 0.0
  %89 = vmatprep.subr.mxu0 0.0
  %90 = vmatpush1.msra.mxu0 0.0
  %91 = vmatprep.subr.mxu0 0.0
  %92 = vmatpush1.msra.mxu0 0.0
  %93 = vmatprep.subr.mxu0 0.0
  %94 = vmatpush1.msra.mxu0 0.0
  %95 = vmatprep.subr.mxu0 0.0
  %96 = vmatpush1.msra.mxu0 0.0
  %97 = vmatprep.subr.mxu0 0.0
  %98 = vmatpush1.msra.mxu0 0.0
  %99 = vmatprep.subr.mxu0 0.0
  %100 = vmatpush1.msra.mxu0 0.0
  %101 = vmatprep.subr.mxu0 0.0
  %102 = vmatpush1.msra.mxu0 0.0
  %103 = vmatprep.subr.mxu0 0.0
  %104 = vmatpush1.msra.mxu0 0.0
  %105 = vmatprep.mubr.f32.mxu0 0.0
  %106 = vmatmul.mubr.f32.gmra.mrb[0].mxu0 %v17
  %v107 = vpop.f32.mrb[0].mxu0
  %v108 = vadd.f32 %v39, %v107
  %v109 = vpop.f32.mrb[0].mxu0
  %110 = vdwg.mxu0
  %v111 = vsub.f32 %v17, %v108
  %v112 = vld [vmem:[%s3] sm:$0x1]
  %v114 = vlaneseq
  %v115 = vshrl.u32 %v114, 7
  %v116 = vsub.s32 0, %v115
  %v117 = vrot.slane %v112, %v116
  %v119 = vmul.f32 %v111, %v117
  %120 = vst [vmem:[%s4] sm:$0xff] %v119
  // Predicated region
  $region18: #{made_forward_direct.1} parent=0 // pred_check
    _
  $region19: #{made_forward_direct.1} parent=0 // pred_check_branch
    %122 = sbr.rel (0) target = $region21
  $region20: #{made_forward_direct.1} parent=0 // pred_region
    _
  $region21: #{made_forward_direct.1} parent=0 // pred_fallthru
    _
  // Predicated region
  $region22: #{made_forward_direct.1} parent=0 // pred_check
    _
  $region23: #{made_forward_direct.1} parent=0 // pred_check_branch
    %124 = sbr.rel (0) target = $region25
  $region24: #{made_forward_direct.1} parent=0 // pred_region
    _
  $region25: #{made_forward_direct.1} parent=0 // pred_fallthru
    _

</llo_original>
